<compile_context>
chip_gen: v6e
topology: v6e:2x2x1
jax: 0.10.0
libtpu: 0.0.40
codegen_flags: <defaults>
</compile_context>

<pallas_src>
import functools

import jax
import jax.numpy as jnp
from jax import lax
from jax.experimental import pallas as pl
from jax.experimental.pallas import tpu as pltpu


# ---------------------------------------------------------------------------
# Kernels
# ---------------------------------------------------------------------------
def _mix_kernel(n_reprs, w_ref, *refs):
    """do_layer_norm=False: out = sum_l w[l] * x_l  (w = gamma * softmax(weights)).

    w_ref : SMEM (n_reprs,) f32        (scalar prefetch)
    refs  : n_reprs VMEM (tile_rows, H) inputs, then VMEM (tile_rows, H) output
    """
    x_refs = refs[:n_reprs]
    o_ref = refs[n_reprs]
    acc = w_ref[0] * x_refs[0][...].astype(jnp.float32)
    for l in range(1, n_reprs):
        acc = acc + w_ref[l] * x_refs[l][...].astype(jnp.float32)
    o_ref[...] = acc.astype(o_ref.dtype)


def _stats_kernel(n_reprs, n_valid, tile_rows, m_ref, *refs):
    """LN pass 1: accumulate per-layer sum and sum-of-squares of (x_l * mask).

    m_ref : VMEM (tile_rows, 1) f32 mask
    refs  : n_reprs VMEM (tile_rows, H) inputs, then VMEM (2*n_reprs, H) f32
            resident accumulator output (rows [0:L) = sums, [L:2L) = sumsq).
    """
    x_refs = refs[:n_reprs]
    o_ref = refs[n_reprs]

    @pl.when(pl.program_id(0) == 0)
    def _init():
        o_ref[...] = jnp.zeros_like(o_ref)

    # Mask rows past the true row count (partial boundary tile).
    row = (pl.program_id(0) * tile_rows
           + lax.broadcasted_iota(jnp.int32, (tile_rows, 1), 0))
    valid = row < n_valid                             # (tile_rows, 1) bool
    m = m_ref[...].astype(jnp.float32)                # (tile_rows, 1)

    sums, sqs = [], []
    for l in range(n_reprs):
        h = jnp.where(valid, x_refs[l][...].astype(jnp.float32) * m, 0.0)
        sums.append(jnp.sum(h, axis=0, keepdims=True))       # (1, H)
        sqs.append(jnp.sum(h * h, axis=0, keepdims=True))    # (1, H)
    upd = jnp.concatenate(sums + sqs, axis=0)                 # (2L, H)
    o_ref[...] = o_ref[...] + upd


def _mix_ln_kernel(n_reprs, c_ref, m_ref, *refs):
    """LN pass 2: out = sum_l scale[l] * (x_l * mask) + bias.

    c_ref : SMEM (n_reprs + 1,) f32; c[l] = gamma*w_l*rstd_l, c[L] = shared bias
    m_ref : VMEM (tile_rows, 1) f32 mask
    refs  : n_reprs VMEM (tile_rows, H) inputs, then VMEM (tile_rows, H) output
    """
    x_refs = refs[:n_reprs]
    o_ref = refs[n_reprs]
    m = m_ref[...].astype(jnp.float32)
    acc = c_ref[0] * (x_refs[0][...].astype(jnp.float32) * m)
    for l in range(1, n_reprs):
        acc = acc + c_ref[l] * (x_refs[l][...].astype(jnp.float32) * m)
    acc = acc + c_ref[n_reprs]   # folded -sum_l gamma*w_l*mu_l*rstd_l
    o_ref[...] = acc.astype(o_ref.dtype)


# ---------------------------------------------------------------------------
# Tiling helpers
# ---------------------------------------------------------------------------
def _vmem_budget_bytes():
    try:
        cap = int(pltpu.get_tpu_info().vmem_capacity_bytes)
    except Exception:
        cap = 64 * 1024 * 1024          # conservative (v7x per-TC) fallback
    return int(cap * 0.6)               # leave headroom for compiler scratch


def _pick_tile_rows(n_rows, h, n_streams, itemsize, vmem_budget):
    """Largest row tile whose double-buffered working set fits the budget."""
    min_rows = max(8, 32 // max(int(itemsize), 1))   # 8 f32 / 16 bf16 / 32 i8
    per_row = 2 * n_streams * h * itemsize + 4 * h   # dbl-buffered streams + f32 acc
    t = vmem_budget // per_row
    t = int(min(max(t, min_rows), 2048))
    t -= t % min_rows
    if n_rows >= min_rows:                           # don't exceed the row count
        t = min(t, (n_rows // min_rows) * min_rows)
    return max(t, min_rows)


# ---------------------------------------------------------------------------
# Wrapper
# ---------------------------------------------------------------------------
def scalar_mix(tensors, weights, gamma, mask=None, do_layer_norm=False,
               tile_rows=None, eps=1e-5):
    """tensors: list of n_reprs arrays of shape (B, S, H)."""
    L = len(tensors)
    B, S, H = tensors[0].shape
    N = B * S
    dtype = tensors[0].dtype
    itemsize = jnp.dtype(dtype).itemsize
    # Collapse (B, S) -> N rows; contiguous reshape, no HBM copy like stack.
    flats = [t.reshape(N, H) for t in tensors]

    budget = _vmem_budget_bytes()
    if tile_rows is None:
        tile_rows = _pick_tile_rows(N, H, L + 2, itemsize, budget)
    grid = (pl.cdiv(N, tile_rows),)

    par_params = pltpu.CompilerParams(
        dimension_semantics=("parallel",), vmem_limit_bytes=budget)

    # Parameter glue (tiny): softmax over weights, fold gamma in (op is linear).
    normed_w = jax.nn.softmax(weights.astype(jnp.float32))
    scaled_w = jnp.asarray(gamma, jnp.float32).reshape(-1)[0] * normed_w  # (L,)

    if not do_layer_norm:
        out = pl.pallas_call(
            functools.partial(_mix_kernel, L),
            out_shape=jax.ShapeDtypeStruct((N, H), dtype),
            grid_spec=pltpu.PrefetchScalarGridSpec(
                num_scalar_prefetch=1,
                grid=grid,
                in_specs=[pl.BlockSpec((tile_rows, H), lambda i, c: (i, 0))
                          for _ in range(L)],
                out_specs=pl.BlockSpec((tile_rows, H), lambda i, c: (i, 0)),
            ),
            compiler_params=par_params,
        )(scaled_w, *flats)
        return out.reshape(B, S, H)

    # ---------------- do_layer_norm=True: two-pass tiled ----------------
    if mask is None:
        mask = jnp.ones((B, S), jnp.float32)
    m2 = mask.reshape(N, 1).astype(jnp.float32)

    # Pass 1: per-layer global sum / sum-of-squares (reduction grid axis).
    stats = pl.pallas_call(
        functools.partial(_stats_kernel, L, N, tile_rows),
        out_shape=jax.ShapeDtypeStruct((2 * L, H), jnp.float32),
        grid_spec=pltpu.PrefetchScalarGridSpec(
            num_scalar_prefetch=0,
            grid=grid,
            in_specs=[pl.BlockSpec((tile_rows, 1), lambda i: (i, 0))] +
                     [pl.BlockSpec((tile_rows, H), lambda i: (i, 0))
                      for _ in range(L)],
            out_specs=pl.BlockSpec((2 * L, H), lambda i: (0, 0)),
        ),
        compiler_params=pltpu.CompilerParams(
            dimension_semantics=("arbitrary",), vmem_limit_bytes=budget),
    )(m2, *flats)

    # Tiny per-layer scalar math (L values) done in plain JAX.
    denom = float(N * H)                      # torch LN normalizes over h.shape
    sum_l = jnp.sum(stats[:L], axis=-1)       # (L,)
    sq_l = jnp.sum(stats[L:], axis=-1)        # (L,)
    mu = sum_l / denom
    var = jnp.maximum(sq_l / denom - mu * mu, 0.0)   # biased variance
    rstd = lax.rsqrt(var + eps)
    scale = scaled_w * rstd                   # (L,)
    bias = -jnp.sum(scale * mu)               # shared constant offset
    coefs = jnp.concatenate([scale, bias[None]])     # (L+1,)

    # Pass 2: tiled weighted mix with folded per-layer affine.
    out = pl.pallas_call(
        functools.partial(_mix_ln_kernel, L),
        out_shape=jax.ShapeDtypeStruct((N, H), dtype),
        grid_spec=pltpu.PrefetchScalarGridSpec(
            num_scalar_prefetch=1,
            grid=grid,
            in_specs=[pl.BlockSpec((tile_rows, 1), lambda i, c: (i, 0))] +
                     [pl.BlockSpec((tile_rows, H), lambda i, c: (i, 0))
                      for _ in range(L)],
            out_specs=pl.BlockSpec((tile_rows, H), lambda i, c: (i, 0)),
        ),
        compiler_params=par_params,
    )(coefs, m2, *flats)
    return out.reshape(B, S, H)


# ---------------------------------------------------------------------------
# Pure-JAX reference (mirrors the PyTorch module)
# ---------------------------------------------------------------------------
def scalar_mix_ref(tensors, weights, gamma, mask=None, do_layer_norm=False):
    nw = jax.nn.softmax(weights.astype(jnp.float32))
    if not do_layer_norm:
        ws = sum(w * h for w, h in zip(nw, tensors))
    else:
        m = mask[..., None].astype(jnp.float32)

        def ln(h):
            mu = jnp.mean(h)
            var = jnp.mean((h - mu) ** 2)
            return (h - mu) * lax.rsqrt(var + 1e-5)

        ws = sum(w * ln(h * m) for w, h in zip(nw, tensors))
    return gamma[0] * ws


# ---------------------------------------------------------------------------
if __name__ == "__main__":
    key = jax.random.PRNGKey(0)
    n_reprs, B, S, H = 3, 2, 8, 128

    # Deterministic parameter init, exactly as in ScalarMix.__init__:
    weights = jnp.zeros((n_reprs,), jnp.float32)   # nn.Parameter(torch.zeros(n))
    gamma = jnp.array([1.0], jnp.float32)          # nn.Parameter(torch.tensor([1.]))

    keys = jax.random.split(key, n_reprs + 1)
    tensors = [jax.random.normal(keys[i], (B, S, H), jnp.float32)
               for i in range(n_reprs)]
    mask = (jax.random.uniform(keys[-1], (B, S)) > 0.3).astype(jnp.float32)

    # --- do_layer_norm=False path (module default) ---
    out = jax.block_until_ready(scalar_mix(tensors, weights, gamma))
    ref = scalar_mix_ref(tensors, weights, gamma)
    assert out.shape == (B, S, H)
    assert jnp.allclose(out, ref, atol=1e-5, rtol=1e-5)

    # --- do_layer_norm=True path ---
    out_ln = jax.block_until_ready(
        scalar_mix(tensors, weights, gamma, mask=mask, do_layer_norm=True))
    ref_ln = scalar_mix_ref(tensors, weights, gamma, mask=mask,
                            do_layer_norm=True)
    assert jnp.allclose(out_ln, ref_ln, atol=1e-4, rtol=1e-4)

    # --- ragged row count (B*S not a multiple of the tile): cdiv + masking ---
    B2, S2 = 4, 5
    keys2 = jax.random.split(jax.random.PRNGKey(1), n_reprs + 1)
    tensors2 = [jax.random.normal(keys2[i], (B2, S2, H), jnp.float32)
                for i in range(n_reprs)]
    mask2 = (jax.random.uniform(keys2[-1], (B2, S2)) > 0.3).astype(jnp.float32)

    out2 = jax.block_until_ready(scalar_mix(tensors2, weights, gamma))
    ref2 = scalar_mix_ref(tensors2, weights, gamma)
    assert jnp.allclose(out2, ref2, atol=1e-5, rtol=1e-5)

    out2_ln = jax.block_until_ready(
        scalar_mix(tensors2, weights, gamma, mask=mask2, do_layer_norm=True))
    ref2_ln = scalar_mix_ref(tensors2, weights, gamma, mask=mask2,
                             do_layer_norm=True)
    assert jnp.allclose(out2_ln, ref2_ln, atol=1e-4, rtol=1e-4)

    print("KERNEL_OK")
</pallas_src>

<mosaic_0001>
module attributes {stable_mosaic.version = 11 : i64} {
  func.func @_mix_kernel(%arg0: i32, %arg1: memref<3xf32, #tpu.memory_space<smem>>, %arg2: memref<16x128xf32, #tpu.memory_space<vmem>>, %arg3: memref<16x128xf32, #tpu.memory_space<vmem>>, %arg4: memref<16x128xf32, #tpu.memory_space<vmem>>, %arg5: memref<16x128xf32, #tpu.memory_space<vmem>>) attributes {dimension_semantics = [#tpu.dimension_semantics<parallel>], iteration_bounds = array<i64: 1>, scalar_prefetch = 1 : i64, scratch_operands = 0 : i64, tpu.core_type = #tpu.core_type<tc>, window_params = [{transform_indices = @transform_0, window_bounds = array<i64: 16, 128>}, {transform_indices = @transform_1, window_bounds = array<i64: 16, 128>}, {transform_indices = @transform_2, window_bounds = array<i64: 16, 128>}, {transform_indices = @transform_3, window_bounds = array<i64: 16, 128>}]} {
    %c0 = arith.constant 0 : index
    %0 = memref.load %arg1[%c0] : memref<3xf32, #tpu.memory_space<smem>>
    %c0_0 = arith.constant 0 : index
    %c0_1 = arith.constant 0 : index
    %1 = vector.load %arg2[%c0_0, %c0_1] : memref<16x128xf32, #tpu.memory_space<vmem>>, vector<16x128xf32>
    %2 = vector.broadcast %0 : f32 to vector<16x128xf32>
    %3 = arith.mulf %2, %1 : vector<16x128xf32>
    %c1 = arith.constant 1 : index
    %4 = memref.load %arg1[%c1] : memref<3xf32, #tpu.memory_space<smem>>
    %c0_2 = arith.constant 0 : index
    %c0_3 = arith.constant 0 : index
    %5 = vector.load %arg3[%c0_2, %c0_3] : memref<16x128xf32, #tpu.memory_space<vmem>>, vector<16x128xf32>
    %6 = vector.broadcast %4 : f32 to vector<16x128xf32>
    %7 = arith.mulf %6, %5 : vector<16x128xf32>
    %8 = arith.addf %3, %7 : vector<16x128xf32>
    %c2 = arith.constant 2 : index
    %9 = memref.load %arg1[%c2] : memref<3xf32, #tpu.memory_space<smem>>
    %c0_4 = arith.constant 0 : index
    %c0_5 = arith.constant 0 : index
    %10 = vector.load %arg4[%c0_4, %c0_5] : memref<16x128xf32, #tpu.memory_space<vmem>>, vector<16x128xf32>
    %11 = vector.broadcast %9 : f32 to vector<16x128xf32>
    %12 = arith.mulf %11, %10 : vector<16x128xf32>
    %13 = arith.addf %8, %12 : vector<16x128xf32>
    %c0_6 = arith.constant 0 : index
    %c0_7 = arith.constant 0 : index
    %14 = vector.load %arg5[%c0_6, %c0_7] : memref<16x128xf32, #tpu.memory_space<vmem>>, vector<16x128xf32>
    tpu.vector_store %arg5[%c0_6, %c0_7], %13 {strides = array<i32>} : memref<16x128xf32, #tpu.memory_space<vmem>>, vector<16x128xf32>,
    return
  }
  func.func @transform_0(%arg0: i32, %arg1: memref<3xf32, #tpu.memory_space<smem>>) -> (i32, i32) {
    %c0_i32 = arith.constant 0 : i32
    %c0_i32_0 = arith.constant 0 : i32
    return %arg0, %c0_i32 : i32, i32
  }
  func.func @transform_1(%arg0: i32, %arg1: memref<3xf32, #tpu.memory_space<smem>>) -> (i32, i32) {
    %c0_i32 = arith.constant 0 : i32
    %c0_i32_0 = arith.constant 0 : i32
    return %arg0, %c0_i32 : i32, i32
  }
  func.func @transform_2(%arg0: i32, %arg1: memref<3xf32, #tpu.memory_space<smem>>) -> (i32, i32) {
    %c0_i32 = arith.constant 0 : i32
    %c0_i32_0 = arith.constant 0 : i32
    return %arg0, %c0_i32 : i32, i32
  }
  func.func @transform_3(%arg0: i32, %arg1: memref<3xf32, #tpu.memory_space<smem>>) -> (i32, i32) {
    %c0_i32 = arith.constant 0 : i32
    %c0_i32_0 = arith.constant 0 : i32
    return %arg0, %c0_i32 : i32, i32
  }
}

</mosaic_0001>

<llo_original>
// kernel: tpu_custom_call.1
$region0: #{tpu_custom_call.1}
  #allocation0 [shape = 'u32[]', space=smem, size = 0x4, offset = 0x4, fixed_abs, tag = 'smem constant byte address 0x4 - core index']
  #allocation1 [shape = 'u32[144,128]{1,0:T(1,128)}', space=vmem, size = 0x12000, scoped, tag = 'internal scratch']
  #allocation2 [shape = 's32[1]{0}', space=sflag, size = 0x4, scoped, tag = 'scoped memory for tpu_custom_call.1']
  #allocation3 [shape = 'u8[512]{0}', space=smem, size = 0x200, scoped, tag = 'prefetched SMEM operand 0']
  %s0 = inlined_call_operand.hbm [shape: f32[3], index: 0, kind: input, shape index: {}]
  %s1 = inlined_call_operand.hbm [shape: f32[16,128], index: 1, kind: input, shape index: {}]
  %s2 = inlined_call_operand.hbm [shape: f32[16,128], index: 2, kind: input, shape index: {}]
  %s3 = inlined_call_operand.hbm [shape: f32[16,128], index: 3, kind: input, shape index: {}]
  %s4 = inlined_call_operand.hbm [shape: f32[16,128], index: 4, kind: output, shape index: {}]
  %s5 = sld [smem:[#allocation0]]
  $region34: #{tpu_custom_call.1} parent=0
    _
  %s7 = ssub.s32 1, %s5
  %s8 = scalar_select 0, %s7, %s5
  %10 = dma.hbm_to_smem %s0, 16, [#allocation3], [#allocation2]
  %11 = dma.done [#allocation2], 16
  %12 = sfence
  $region1: #{tpu_custom_call.1} parent=0
    #allocation4 [shape = 'u8[8192]{0}', space=vmem, size = 0x2000, scoped, tag = 'input window, operand 1, single buffered']
    #allocation5 [shape = 's32[1]{0}', space=sflag, size = 0x4, scoped, tag = 'scoped memory for tpu_custom_call.1']
    #allocation6 [shape = 's32[1]{0}', space=sflag, size = 0x4, scoped, tag = 'scoped memory for tpu_custom_call.1']
    #allocation7 [shape = 'u8[8192]{0}', space=vmem, size = 0x2000, scoped, tag = 'input window, operand 2, single buffered']
    #allocation8 [shape = 's32[1]{0}', space=sflag, size = 0x4, scoped, tag = 'scoped memory for tpu_custom_call.1']
    #allocation9 [shape = 'u8[8192]{0}', space=vmem, size = 0x2000, scoped, tag = 'input window, operand 3, single buffered']
    #allocation10 [shape = 'u8[8192]{0}', space=vmem, size = 0x2000, scoped, tag = 'output window, operand 0, single buffered']
    %13 = vsyncpa [#allocation5], 0
    %14 = vsyncpa [#allocation8], 0
    %15 = vsyncpa [#allocation6], 0
    // Predicated region
    $region2: #{tpu_custom_call.1} parent=1 // pred_check
      _
    $region3: #{tpu_custom_call.1} parent=1 // pred_check_branch
      %17 = sbr.rel (0) target = $region5
    $region4: #{tpu_custom_call.1} parent=1 // pred_region
      %s19 = ssub.s32 256, 256
      %20 = vsyncadd [#allocation5], %s19
      %s21 = sshll.u32 [#allocation4], 4
      %s22 = int_to_ptr.vmem [resolvable:$true] %s21
      %27 = dma.hbm_to_vmem [thread:$0]  %s1, 256, %s22, [#allocation5], 128, 128, 8
    $region5: #{tpu_custom_call.1} parent=1 // pred_fallthru
      _
    // Predicated region
    $region6: #{tpu_custom_call.1} parent=1 // pred_check
      _
    $region7: #{tpu_custom_call.1} parent=1 // pred_check_branch
      %29 = sbr.rel (0) target = $region9
    $region8: #{tpu_custom_call.1} parent=1 // pred_region
      %s31 = ssub.s32 256, 256
      %32 = vsyncadd [#allocation8], %s31
      %s33 = sshll.u32 [#allocation7], 4
      %s34 = int_to_ptr.vmem [resolvable:$true] %s33
      %39 = dma.hbm_to_vmem [thread:$0]  %s2, 256, %s34, [#allocation8], 128, 128, 8
    $region9: #{tpu_custom_call.1} parent=1 // pred_fallthru
      _
    // Predicated region
    $region10: #{tpu_custom_call.1} parent=1 // pred_check
      _
    $region11: #{tpu_custom_call.1} parent=1 // pred_check_branch
      %41 = sbr.rel (0) target = $region13
    $region12: #{tpu_custom_call.1} parent=1 // pred_region
      %s43 = ssub.s32 256, 256
      %44 = vsyncadd [#allocation8], %s43
      %s45 = sshll.u32 [#allocation9], 4
      %s46 = int_to_ptr.vmem [resolvable:$true] %s45
      %51 = dma.hbm_to_vmem [thread:$0]  %s3, 256, %s46, [#allocation8], 128, 128, 8
    $region13: #{tpu_custom_call.1} parent=1 // pred_fallthru
      _
    // Predicated region
    $region14: #{tpu_custom_call.1} parent=1 // pred_check
      _
    $region15: #{tpu_custom_call.1} parent=1 // pred_check_branch
      %53 = sbr.rel (0) target = $region17
    $region16: #{tpu_custom_call.1} parent=1 // pred_region
      %54 = dma.done [#allocation5], 256
    $region17: #{tpu_custom_call.1} parent=1 // pred_fallthru
      _
    // Predicated region
    $region18: #{tpu_custom_call.1} parent=1 // pred_check
      _
    $region19: #{tpu_custom_call.1} parent=1 // pred_check_branch
      %56 = sbr.rel (0) target = $region21
    $region20: #{tpu_custom_call.1} parent=1 // pred_region
      %57 = dma.done [#allocation8], 256
    $region21: #{tpu_custom_call.1} parent=1 // pred_fallthru
      _
    // Predicated region
    $region22: #{tpu_custom_call.1} parent=1 // pred_check
      _
    $region23: #{tpu_custom_call.1} parent=1 // pred_check_branch
      %59 = sbr.rel (0) target = $region25
    $region24: #{tpu_custom_call.1} parent=1 // pred_region
      %60 = dma.done [#allocation8], 256
    $region25: #{tpu_custom_call.1} parent=1 // pred_fallthru
      _
    %s61 = sld [smem:[#allocation3]]
    %v62 = vld [vmem:[#allocation4] sm:$0xff]
    %v63 = vld [vmem:[#allocation4 + $0x8] sm:$0xff]
    %v64 = vstv %s61
    %v65 = vmul.f32 %v64, %v62
    %v66 = vmul.f32 %v64, %v63
    %s67 = sld [smem:[#allocation3 + $0x1]]
    %v68 = vld [vmem:[#allocation7] sm:$0xff]
    %v69 = vld [vmem:[#allocation7 + $0x8] sm:$0xff]
    %v70 = vstv %s67
    %v71 = vmul.f32 %v70, %v68
    %v72 = vmul.f32 %v70, %v69
    %v73 = vadd.f32 %v65, %v71
    %v74 = vadd.f32 %v66, %v72
    %s75 = sld [smem:[#allocation3 + $0x2]]
    %v76 = vld [vmem:[#allocation9] sm:$0xff]
    %v77 = vld [vmem:[#allocation9 + $0x8] sm:$0xff]
    %v78 = vstv %s75
    %v79 = vmul.f32 %v78, %v76
    %v80 = vmul.f32 %v78, %v77
    %v81 = vadd.f32 %v73, %v79
    %v82 = vadd.f32 %v74, %v80
    %83 = vst [vmem:[#allocation10] sm:$0xff] %v81
    %84 = vst [vmem:[#allocation10 + $0x8] sm:$0xff] %v82
    // Predicated region
    $region26: #{tpu_custom_call.1} parent=1 // pred_check
      _
    $region27: #{tpu_custom_call.1} parent=1 // pred_check_branch
      %86 = sbr.rel (0) target = $region29
    $region28: #{tpu_custom_call.1} parent=1 // pred_region
      %s88 = ssub.s32 256, 256
      %89 = vsyncadd [#allocation6], %s88
      %s90 = sshll.u32 [#allocation10], 4
      %s91 = int_to_ptr.vmem [resolvable:$true] %s90
      %96 = dma.vmem_to_hbm [thread:$0]  %s91, 256, %s4, [#allocation6], 128, 128, 8
    $region29: #{tpu_custom_call.1} parent=1 // pred_fallthru
      _
    // Predicated region
    $region30: #{tpu_custom_call.1} parent=1 // pred_check
      _
    $region31: #{tpu_custom_call.1} parent=1 // pred_check_branch
      %98 = sbr.rel (0) target = $region33
    $region32: #{tpu_custom_call.1} parent=1 // pred_region
      %99 = dma.done [#allocation6], 256
    $region33: #{tpu_custom_call.1} parent=1 // pred_fallthru
      _
    %100 = vsyncpa [#allocation5], 1
    %101 = vsyncpa [#allocation8], 1
    %102 = vsyncpa [#allocation6], 1

</llo_original>
